<compile_context>
chip_gen: v7x
topology: tpu7x:2x2x1
jax: 0.10.0
libtpu: 0.0.40
codegen_flags: <defaults>
</compile_context>

<pallas_src>
import jax
import jax.numpy as jnp
from jax.experimental import pallas as pl
from jax.experimental.pallas import tpu as pltpu


def embedding_kernel(x_ref, w1_ref, w2_ref, bo_ref, o_ref):
    # x_ref:  (TB, D_in)   input rows for this batch tile
    # w1_ref: (TE, D_in)   embedding-layer weight rows for this e-tile
    # w2_ref: (1, H)       hidden_size_layer weight row (resident)
    # bo_ref: (TE, H)      folded output bias  b1[e]*w2[h] + b2[h]
    # o_ref:  (TB, TE*H)   lane-dense output tile
    te, h = bo_ref.shape
    # Small MXU matmul: emb[b, e] = sum_d x[b, d] * w1[e, d]  (contract dim 1 of both)
    emb = jax.lax.dot_general(
        x_ref[...], w1_ref[...],
        dimension_numbers=(((1,), (1,)), ((), ())),
        preferred_element_type=jnp.float32,
    )                                    # (TB, TE)
    w2_row = w2_ref[...]                 # (1, H)
    # VPU broadcast-expand: column e of emb spans lanes [e*H, (e+1)*H).
    # Static unroll (TE <= 64); each store is a (TB, H) slab, sublane-major = TB,
    # so it matches the 2D output tile layout with no relayout.
    for e in range(te):
        o_ref[:, e * h:(e + 1) * h] = (
            emb[:, e:e + 1] * w2_row + bo_ref[e:e + 1, :]
        ).astype(o_ref.dtype)


def _round_up(n, m):
    return ((n + m - 1) // m) * m


def _vmem_limit_bytes():
    """Generation-aware scoped-VMEM limit (~3/4 of physical per-core VMEM)."""
    cap = None
    try:
        info = pltpu.get_tpu_info()
        cap = int(getattr(info, "vmem_capacity_bytes", 0)) or None
    except Exception:
        cap = None
    if cap is None:
        cap = 64 * 1024 * 1024            # conservative fallback (v7x per-core)
    return int(min(cap * 3 // 4, 112 * 1024 * 1024))


def _choose_te(Ep, H):
    """e-tile: multiple of 8 dividing Ep, with TE*H a multiple of 128 (aligned,
    unmasked lane-dense stores) and a modest per-output-row footprint."""
    for t in (64, 32, 16, 8):
        if Ep % t == 0 and (t * H) % 128 == 0 and t * H * 4 <= (2 << 20):
            return t
    return Ep   # single e-tile; block == full array width is always legal


def _choose_tb(Bp, d_in, te, h, budget_bytes):
    """Batch tile: multiple of 8 dividing Bp (no padded-row writeback), as large
    as the double-buffered input/output tiles allow under the VMEM budget."""
    itemsize = 4
    per_row = 2 * (d_in + te * h) * itemsize            # db input row + db output row
    fixed = 2 * (te * d_in + te * h + h) * itemsize     # w1/b_out tiles + w2 (db)
    avail = max(budget_bytes - fixed, 8 * per_row)
    tb = min(Bp, 2048, avail // per_row)
    tb = max(8, (tb // 8) * 8)
    while tb > 8 and Bp % tb != 0:                       # snap to a divisor of Bp
        tb -= 8
    return int(tb)


def embedding_forward(x, w1, b1, w2, b2):
    """x: (B, D_in); w1: (E, D_in); b1: (E,); w2: (H, 1); b2: (H,).
    Returns (B, E, H) float32, matching the PyTorch forward."""
    x = x.astype(jnp.float32)
    B, D_in = x.shape
    E = w1.shape[0]
    H = w2.shape[0]

    # Tiny one-time prep (folds constant-foldable under jit):
    w2v = w2.reshape(-1).astype(jnp.float32)                      # (H,)
    w2_row = w2v[None, :]                                         # (1, H)
    # out = (x @ w1.T) * w2 + (b1*w2 + b2): fold b1 into a per-(e,h) bias.
    b_out = (b1.astype(jnp.float32)[:, None] * w2v[None, :]
             + b2.astype(jnp.float32)[None, :])                   # (E, H)

    # --- E padding / e-tile ---
    Ep = _round_up(E, 8)
    TE = _choose_te(Ep, H)
    w1p = w1.astype(jnp.float32)
    if Ep != E:
        w1p = jnp.pad(w1p, ((0, Ep - E), (0, 0)))
        b_out = jnp.pad(b_out, ((0, Ep - E), (0, 0)))

    # --- batch padding / batch tile ---
    Bp = _round_up(B, 8)
    vmem_limit = _vmem_limit_bytes()
    TB = _choose_tb(Bp, D_in, TE, H, int(vmem_limit * 0.8))
    if Bp != B:
        x = jnp.pad(x, ((0, Bp - B), (0, 0)))

    n_b, n_e = Bp // TB, Ep // TE

    out2d = pl.pallas_call(
        embedding_kernel,
        out_shape=jax.ShapeDtypeStruct((Bp, Ep * H), jnp.float32),
        grid_spec=pl.GridSpec(
            grid=(n_b, n_e),
            in_specs=[
                pl.BlockSpec((TB, D_in), lambda i, j: (i, 0)),   # x batch tile
                pl.BlockSpec((TE, D_in), lambda i, j: (j, 0)),   # w1 rows for e-tile
                pl.BlockSpec((1, H),     lambda i, j: (0, 0)),   # w2 (resident)
                pl.BlockSpec((TE, H),    lambda i, j: (j, 0)),   # folded bias rows
            ],
            out_specs=pl.BlockSpec((TB, TE * H), lambda i, j: (i, j)),
        ),
        compiler_params=pltpu.CompilerParams(
            dimension_semantics=("parallel", "parallel"),
            vmem_limit_bytes=vmem_limit,
        ),
    )(x, w1p, w2_row, b_out)

    # Lane-dense 2D out of the kernel; reshape + strip padding in plain JAX.
    return out2d.reshape(Bp, Ep, H)[:B, :E, :]


if __name__ == "__main__":
    # Small shapes consistent with the module's __init__:
    #   args.input_dim=32, args.embedding_dim=16, args.hidden_size=32, batch=8
    B, D_IN, E, H = 8, 32, 16, 32

    key = jax.random.PRNGKey(0)
    kx, k1, k2, k3, k4 = jax.random.split(key, 5)

    x = jax.random.normal(kx, (B, D_IN), dtype=jnp.float32)

    # PyTorch-style uniform(-1/sqrt(fan_in), +1/sqrt(fan_in)) init
    bound1 = 1.0 / jnp.sqrt(jnp.float32(D_IN))
    w1 = jax.random.uniform(k1, (E, D_IN), jnp.float32, -bound1, bound1)  # embedding_layer.weight
    b1 = jax.random.uniform(k2, (E,), jnp.float32, -bound1, bound1)       # embedding_layer.bias
    bound2 = 1.0  # fan_in = 1
    w2 = jax.random.uniform(k3, (H, 1), jnp.float32, -bound2, bound2)     # hidden_size_layer.weight
    b2 = jax.random.uniform(k4, (H,), jnp.float32, -bound2, bound2)       # hidden_size_layer.bias

    out = embedding_forward(x, w1, b1, w2, b2)
    out = jax.block_until_ready(out)

    # Pure-JAX reference (mirrors the PyTorch forward exactly)
    emb_ref = x @ w1.T + b1                                       # (B, E)
    ref = emb_ref[:, :, None] * w2[:, 0][None, None, :] + b2[None, None, :]   # (B, E, H)
    assert out.shape == (B, E, H)
    assert jnp.allclose(out, ref, atol=1e-5, rtol=1e-5)

    print("KERNEL_OK")
</pallas_src>

<mosaic_0001>
module attributes {stable_mosaic.version = 11 : i64} {
  func.func @embedding_kernel(%arg0: i32, %arg1: i32, %arg2: memref<8x32xf32, #tpu.memory_space<vmem>>, %arg3: memref<16x32xf32, #tpu.memory_space<vmem>>, %arg4: memref<1x32xf32, #tpu.memory_space<vmem>>, %arg5: memref<16x32xf32, #tpu.memory_space<vmem>>, %arg6: memref<8x512xf32, #tpu.memory_space<vmem>>) attributes {dimension_semantics = [#tpu.dimension_semantics<parallel>, #tpu.dimension_semantics<parallel>], iteration_bounds = array<i64: 1, 1>, scalar_prefetch = 0 : i64, scratch_operands = 0 : i64, tpu.core_type = #tpu.core_type<tc>, window_params = [{transform_indices = @transform_0, window_bounds = array<i64: 8, 32>}, {transform_indices = @transform_1, window_bounds = array<i64: 16, 32>}, {pipeline_mode = #tpu.pipeline_mode<synchronous>, transform_indices = @transform_2, window_bounds = array<i64: 1, 32>}, {transform_indices = @transform_3, window_bounds = array<i64: 16, 32>}, {transform_indices = @transform_4, window_bounds = array<i64: 8, 512>}]} {
    %c0 = arith.constant 0 : index
    %c0_0 = arith.constant 0 : index
    %0 = vector.load %arg2[%c0, %c0_0] : memref<8x32xf32, #tpu.memory_space<vmem>>, vector<8x32xf32>
    %c0_1 = arith.constant 0 : index
    %c0_2 = arith.constant 0 : index
    %1 = vector.load %arg3[%c0_1, %c0_2] : memref<16x32xf32, #tpu.memory_space<vmem>>, vector<16x32xf32>
    %cst = arith.constant dense<0.000000e+00> : vector<8x16xf32>
    %2 = tpu.matmul %0, %1, %cst {dimension_numbers = #tpu.dot_dimension_numbers<[1], [1], [0], [0], [0, 0, 1, 0], [], []>} : vector<8x32xf32>, vector<16x32xf32>, vector<8x16xf32> -> vector<8x16xf32>
    %c0_3 = arith.constant 0 : index
    %c0_4 = arith.constant 0 : index
    %3 = vector.load %arg4[%c0_3, %c0_4] : memref<1x32xf32, #tpu.memory_space<vmem>>, vector<1x32xf32>
    %4 = vector.extract_strided_slice %2 {offsets = [0, 0], sizes = [8, 1], strides = [1, 1]} : vector<8x16xf32> to vector<8x1xf32>
    %5 = vector.broadcast %4 : vector<8x1xf32> to vector<8x32xf32>
    %6 = vector.broadcast %3 : vector<1x32xf32> to vector<8x32xf32>
    %7 = arith.mulf %5, %6 : vector<8x32xf32>
    %c0_5 = arith.constant 0 : index
    %c0_6 = arith.constant 0 : index
    %8 = vector.load %arg5[%c0_5, %c0_6] : memref<16x32xf32, #tpu.memory_space<vmem>>, vector<1x32xf32>
    %9 = vector.broadcast %8 : vector<1x32xf32> to vector<8x32xf32>
    %10 = arith.addf %7, %9 : vector<8x32xf32>
    %c0_7 = arith.constant 0 : index
    %c0_8 = arith.constant 0 : index
    %11 = vector.load %arg6[%c0_7, %c0_8] : memref<8x512xf32, #tpu.memory_space<vmem>>, vector<8x32xf32>
    tpu.vector_store %arg6[%c0_7, %c0_8], %10 {strides = array<i32>} : memref<8x512xf32, #tpu.memory_space<vmem>>, vector<8x32xf32>,
    %12 = vector.extract_strided_slice %2 {offsets = [0, 1], sizes = [8, 1], strides = [1, 1]} : vector<8x16xf32> to vector<8x1xf32>
    %13 = vector.broadcast %12 : vector<8x1xf32> to vector<8x32xf32>
    %14 = vector.broadcast %3 : vector<1x32xf32> to vector<8x32xf32>
    %15 = arith.mulf %13, %14 : vector<8x32xf32>
    %c1 = arith.constant 1 : index
    %c0_9 = arith.constant 0 : index
    %16 = vector.load %arg5[%c1, %c0_9] : memref<16x32xf32, #tpu.memory_space<vmem>>, vector<1x32xf32>
    %17 = vector.broadcast %16 : vector<1x32xf32> to vector<8x32xf32>
    %18 = arith.addf %15, %17 : vector<8x32xf32>
    %c0_10 = arith.constant 0 : index
    %c32 = arith.constant 32 : index
    %19 = vector.load %arg6[%c0_10, %c32] : memref<8x512xf32, #tpu.memory_space<vmem>>, vector<8x32xf32>
    tpu.vector_store %arg6[%c0_10, %c32], %18 {strides = array<i32>} : memref<8x512xf32, #tpu.memory_space<vmem>>, vector<8x32xf32>,
    %20 = vector.extract_strided_slice %2 {offsets = [0, 2], sizes = [8, 1], strides = [1, 1]} : vector<8x16xf32> to vector<8x1xf32>
    %21 = vector.broadcast %20 : vector<8x1xf32> to vector<8x32xf32>
    %22 = vector.broadcast %3 : vector<1x32xf32> to vector<8x32xf32>
    %23 = arith.mulf %21, %22 : vector<8x32xf32>
    %c2 = arith.constant 2 : index
    %c0_11 = arith.constant 0 : index
    %24 = vector.load %arg5[%c2, %c0_11] : memref<16x32xf32, #tpu.memory_space<vmem>>, vector<1x32xf32>
    %25 = vector.broadcast %24 : vector<1x32xf32> to vector<8x32xf32>
    %26 = arith.addf %23, %25 : vector<8x32xf32>
    %c0_12 = arith.constant 0 : index
    %c64 = arith.constant 64 : index
    %27 = vector.load %arg6[%c0_12, %c64] : memref<8x512xf32, #tpu.memory_space<vmem>>, vector<8x32xf32>
    tpu.vector_store %arg6[%c0_12, %c64], %26 {strides = array<i32>} : memref<8x512xf32, #tpu.memory_space<vmem>>, vector<8x32xf32>,
    %28 = vector.extract_strided_slice %2 {offsets = [0, 3], sizes = [8, 1], strides = [1, 1]} : vector<8x16xf32> to vector<8x1xf32>
    %29 = vector.broadcast %28 : vector<8x1xf32> to vector<8x32xf32>
    %30 = vector.broadcast %3 : vector<1x32xf32> to vector<8x32xf32>
    %31 = arith.mulf %29, %30 : vector<8x32xf32>
    %c3 = arith.constant 3 : index
    %c0_13 = arith.constant 0 : index
    %32 = vector.load %arg5[%c3, %c0_13] : memref<16x32xf32, #tpu.memory_space<vmem>>, vector<1x32xf32>
    %33 = vector.broadcast %32 : vector<1x32xf32> to vector<8x32xf32>
    %34 = arith.addf %31, %33 : vector<8x32xf32>
    %c0_14 = arith.constant 0 : index
    %c96 = arith.constant 96 : index
    %35 = vector.load %arg6[%c0_14, %c96] : memref<8x512xf32, #tpu.memory_space<vmem>>, vector<8x32xf32>
    tpu.vector_store %arg6[%c0_14, %c96], %34 {strides = array<i32>} : memref<8x512xf32, #tpu.memory_space<vmem>>, vector<8x32xf32>,
    %36 = vector.extract_strided_slice %2 {offsets = [0, 4], sizes = [8, 1], strides = [1, 1]} : vector<8x16xf32> to vector<8x1xf32>
    %37 = vector.broadcast %36 : vector<8x1xf32> to vector<8x32xf32>
    %38 = vector.broadcast %3 : vector<1x32xf32> to vector<8x32xf32>
    %39 = arith.mulf %37, %38 : vector<8x32xf32>
    %c4 = arith.constant 4 : index
    %c0_15 = arith.constant 0 : index
    %40 = vector.load %arg5[%c4, %c0_15] : memref<16x32xf32, #tpu.memory_space<vmem>>, vector<1x32xf32>
    %41 = vector.broadcast %40 : vector<1x32xf32> to vector<8x32xf32>
    %42 = arith.addf %39, %41 : vector<8x32xf32>
    %c0_16 = arith.constant 0 : index
    %c128 = arith.constant 128 : index
    %43 = vector.load %arg6[%c0_16, %c128] : memref<8x512xf32, #tpu.memory_space<vmem>>, vector<8x32xf32>
    tpu.vector_store %arg6[%c0_16, %c128], %42 {strides = array<i32>} : memref<8x512xf32, #tpu.memory_space<vmem>>, vector<8x32xf32>,
    %44 = vector.extract_strided_slice %2 {offsets = [0, 5], sizes = [8, 1], strides = [1, 1]} : vector<8x16xf32> to vector<8x1xf32>
    %45 = vector.broadcast %44 : vector<8x1xf32> to vector<8x32xf32>
    %46 = vector.broadcast %3 : vector<1x32xf32> to vector<8x32xf32>
    %47 = arith.mulf %45, %46 : vector<8x32xf32>
    %c5 = arith.constant 5 : index
    %c0_17 = arith.constant 0 : index
    %48 = vector.load %arg5[%c5, %c0_17] : memref<16x32xf32, #tpu.memory_space<vmem>>, vector<1x32xf32>
    %49 = vector.broadcast %48 : vector<1x32xf32> to vector<8x32xf32>
    %50 = arith.addf %47, %49 : vector<8x32xf32>
    %c0_18 = arith.constant 0 : index
    %c160 = arith.constant 160 : index
    %51 = vector.load %arg6[%c0_18, %c160] : memref<8x512xf32, #tpu.memory_space<vmem>>, vector<8x32xf32>
    tpu.vector_store %arg6[%c0_18, %c160], %50 {strides = array<i32>} : memref<8x512xf32, #tpu.memory_space<vmem>>, vector<8x32xf32>,
    %52 = vector.extract_strided_slice %2 {offsets = [0, 6], sizes = [8, 1], strides = [1, 1]} : vector<8x16xf32> to vector<8x1xf32>
    %53 = vector.broadcast %52 : vector<8x1xf32> to vector<8x32xf32>
    %54 = vector.broadcast %3 : vector<1x32xf32> to vector<8x32xf32>
    %55 = arith.mulf %53, %54 : vector<8x32xf32>
    %c6 = arith.constant 6 : index
    %c0_19 = arith.constant 0 : index
    %56 = vector.load %arg5[%c6, %c0_19] : memref<16x32xf32, #tpu.memory_space<vmem>>, vector<1x32xf32>
    %57 = vector.broadcast %56 : vector<1x32xf32> to vector<8x32xf32>
    %58 = arith.addf %55, %57 : vector<8x32xf32>
    %c0_20 = arith.constant 0 : index
    %c192 = arith.constant 192 : index
    %59 = vector.load %arg6[%c0_20, %c192] : memref<8x512xf32, #tpu.memory_space<vmem>>, vector<8x32xf32>
    tpu.vector_store %arg6[%c0_20, %c192], %58 {strides = array<i32>} : memref<8x512xf32, #tpu.memory_space<vmem>>, vector<8x32xf32>,
    %60 = vector.extract_strided_slice %2 {offsets = [0, 7], sizes = [8, 1], strides = [1, 1]} : vector<8x16xf32> to vector<8x1xf32>
    %61 = vector.broadcast %60 : vector<8x1xf32> to vector<8x32xf32>
    %62 = vector.broadcast %3 : vector<1x32xf32> to vector<8x32xf32>
    %63 = arith.mulf %61, %62 : vector<8x32xf32>
    %c7 = arith.constant 7 : index
    %c0_21 = arith.constant 0 : index
    %64 = vector.load %arg5[%c7, %c0_21] : memref<16x32xf32, #tpu.memory_space<vmem>>, vector<1x32xf32>
    %65 = vector.broadcast %64 : vector<1x32xf32> to vector<8x32xf32>
    %66 = arith.addf %63, %65 : vector<8x32xf32>
    %c0_22 = arith.constant 0 : index
    %c224 = arith.constant 224 : index
    %67 = vector.load %arg6[%c0_22, %c224] : memref<8x512xf32, #tpu.memory_space<vmem>>, vector<8x32xf32>
    tpu.vector_store %arg6[%c0_22, %c224], %66 {strides = array<i32>} : memref<8x512xf32, #tpu.memory_space<vmem>>, vector<8x32xf32>,
    %68 = vector.extract_strided_slice %2 {offsets = [0, 8], sizes = [8, 1], strides = [1, 1]} : vector<8x16xf32> to vector<8x1xf32>
    %69 = vector.broadcast %68 : vector<8x1xf32> to vector<8x32xf32>
    %70 = vector.broadcast %3 : vector<1x32xf32> to vector<8x32xf32>
    %71 = arith.mulf %69, %70 : vector<8x32xf32>
    %c8 = arith.constant 8 : index
    %c0_23 = arith.constant 0 : index
    %72 = vector.load %arg5[%c8, %c0_23] : memref<16x32xf32, #tpu.memory_space<vmem>>, vector<1x32xf32>
    %73 = vector.broadcast %72 : vector<1x32xf32> to vector<8x32xf32>
    %74 = arith.addf %71, %73 : vector<8x32xf32>
    %c0_24 = arith.constant 0 : index
    %c256 = arith.constant 256 : index
    %75 = vector.load %arg6[%c0_24, %c256] : memref<8x512xf32, #tpu.memory_space<vmem>>, vector<8x32xf32>
    tpu.vector_store %arg6[%c0_24, %c256], %74 {strides = array<i32>} : memref<8x512xf32, #tpu.memory_space<vmem>>, vector<8x32xf32>,
    %76 = vector.extract_strided_slice %2 {offsets = [0, 9], sizes = [8, 1], strides = [1, 1]} : vector<8x16xf32> to vector<8x1xf32>
    %77 = vector.broadcast %76 : vector<8x1xf32> to vector<8x32xf32>
    %78 = vector.broadcast %3 : vector<1x32xf32> to vector<8x32xf32>
    %79 = arith.mulf %77, %78 : vector<8x32xf32>
    %c9 = arith.constant 9 : index
    %c0_25 = arith.constant 0 : index
    %80 = vector.load %arg5[%c9, %c0_25] : memref<16x32xf32, #tpu.memory_space<vmem>>, vector<1x32xf32>
    %81 = vector.broadcast %80 : vector<1x32xf32> to vector<8x32xf32>
    %82 = arith.addf %79, %81 : vector<8x32xf32>
    %c0_26 = arith.constant 0 : index
    %c288 = arith.constant 288 : index
    %83 = vector.load %arg6[%c0_26, %c288] : memref<8x512xf32, #tpu.memory_space<vmem>>, vector<8x32xf32>
    tpu.vector_store %arg6[%c0_26, %c288], %82 {strides = array<i32>} : memref<8x512xf32, #tpu.memory_space<vmem>>, vector<8x32xf32>,
    %84 = vector.extract_strided_slice %2 {offsets = [0, 10], sizes = [8, 1], strides = [1, 1]} : vector<8x16xf32> to vector<8x1xf32>
    %85 = vector.broadcast %84 : vector<8x1xf32> to vector<8x32xf32>
    %86 = vector.broadcast %3 : vector<1x32xf32> to vector<8x32xf32>
    %87 = arith.mulf %85, %86 : vector<8x32xf32>
    %c10 = arith.constant 10 : index
    %c0_27 = arith.constant 0 : index
    %88 = vector.load %arg5[%c10, %c0_27] : memref<16x32xf32, #tpu.memory_space<vmem>>, vector<1x32xf32>
    %89 = vector.broadcast %88 : vector<1x32xf32> to vector<8x32xf32>
    %90 = arith.addf %87, %89 : vector<8x32xf32>
    %c0_28 = arith.constant 0 : index
    %c320 = arith.constant 320 : index
    %91 = vector.load %arg6[%c0_28, %c320] : memref<8x512xf32, #tpu.memory_space<vmem>>, vector<8x32xf32>
    tpu.vector_store %arg6[%c0_28, %c320], %90 {strides = array<i32>} : memref<8x512xf32, #tpu.memory_space<vmem>>, vector<8x32xf32>,
    %92 = vector.extract_strided_slice %2 {offsets = [0, 11], sizes = [8, 1], strides = [1, 1]} : vector<8x16xf32> to vector<8x1xf32>
    %93 = vector.broadcast %92 : vector<8x1xf32> to vector<8x32xf32>
    %94 = vector.broadcast %3 : vector<1x32xf32> to vector<8x32xf32>
    %95 = arith.mulf %93, %94 : vector<8x32xf32>
    %c11 = arith.constant 11 : index
    %c0_29 = arith.constant 0 : index
    %96 = vector.load %arg5[%c11, %c0_29] : memref<16x32xf32, #tpu.memory_space<vmem>>, vector<1x32xf32>
    %97 = vector.broadcast %96 : vector<1x32xf32> to vector<8x32xf32>
    %98 = arith.addf %95, %97 : vector<8x32xf32>
    %c0_30 = arith.constant 0 : index
    %c352 = arith.constant 352 : index
    %99 = vector.load %arg6[%c0_30, %c352] : memref<8x512xf32, #tpu.memory_space<vmem>>, vector<8x32xf32>
    tpu.vector_store %arg6[%c0_30, %c352], %98 {strides = array<i32>} : memref<8x512xf32, #tpu.memory_space<vmem>>, vector<8x32xf32>,
    %100 = vector.extract_strided_slice %2 {offsets = [0, 12], sizes = [8, 1], strides = [1, 1]} : vector<8x16xf32> to vector<8x1xf32>
    %101 = vector.broadcast %100 : vector<8x1xf32> to vector<8x32xf32>
    %102 = vector.broadcast %3 : vector<1x32xf32> to vector<8x32xf32>
    %103 = arith.mulf %101, %102 : vector<8x32xf32>
    %c12 = arith.constant 12 : index
    %c0_31 = arith.constant 0 : index
    %104 = vector.load %arg5[%c12, %c0_31] : memref<16x32xf32, #tpu.memory_space<vmem>>, vector<1x32xf32>
    %105 = vector.broadcast %104 : vector<1x32xf32> to vector<8x32xf32>
    %106 = arith.addf %103, %105 : vector<8x32xf32>
    %c0_32 = arith.constant 0 : index
    %c384 = arith.constant 384 : index
    %107 = vector.load %arg6[%c0_32, %c384] : memref<8x512xf32, #tpu.memory_space<vmem>>, vector<8x32xf32>
    tpu.vector_store %arg6[%c0_32, %c384], %106 {strides = array<i32>} : memref<8x512xf32, #tpu.memory_space<vmem>>, vector<8x32xf32>,
    %108 = vector.extract_strided_slice %2 {offsets = [0, 13], sizes = [8, 1], strides = [1, 1]} : vector<8x16xf32> to vector<8x1xf32>
    %109 = vector.broadcast %108 : vector<8x1xf32> to vector<8x32xf32>
    %110 = vector.broadcast %3 : vector<1x32xf32> to vector<8x32xf32>
    %111 = arith.mulf %109, %110 : vector<8x32xf32>
    %c13 = arith.constant 13 : index
    %c0_33 = arith.constant 0 : index
    %112 = vector.load %arg5[%c13, %c0_33] : memref<16x32xf32, #tpu.memory_space<vmem>>, vector<1x32xf32>
    %113 = vector.broadcast %112 : vector<1x32xf32> to vector<8x32xf32>
    %114 = arith.addf %111, %113 : vector<8x32xf32>
    %c0_34 = arith.constant 0 : index
    %c416 = arith.constant 416 : index
    %115 = vector.load %arg6[%c0_34, %c416] : memref<8x512xf32, #tpu.memory_space<vmem>>, vector<8x32xf32>
    tpu.vector_store %arg6[%c0_34, %c416], %114 {strides = array<i32>} : memref<8x512xf32, #tpu.memory_space<vmem>>, vector<8x32xf32>,
    %116 = vector.extract_strided_slice %2 {offsets = [0, 14], sizes = [8, 1], strides = [1, 1]} : vector<8x16xf32> to vector<8x1xf32>
    %117 = vector.broadcast %116 : vector<8x1xf32> to vector<8x32xf32>
    %118 = vector.broadcast %3 : vector<1x32xf32> to vector<8x32xf32>
    %119 = arith.mulf %117, %118 : vector<8x32xf32>
    %c14 = arith.constant 14 : index
    %c0_35 = arith.constant 0 : index
    %120 = vector.load %arg5[%c14, %c0_35] : memref<16x32xf32, #tpu.memory_space<vmem>>, vector<1x32xf32>
    %121 = vector.broadcast %120 : vector<1x32xf32> to vector<8x32xf32>
    %122 = arith.addf %119, %121 : vector<8x32xf32>
    %c0_36 = arith.constant 0 : index
    %c448 = arith.constant 448 : index
    %123 = vector.load %arg6[%c0_36, %c448] : memref<8x512xf32, #tpu.memory_space<vmem>>, vector<8x32xf32>
    tpu.vector_store %arg6[%c0_36, %c448], %122 {strides = array<i32>} : memref<8x512xf32, #tpu.memory_space<vmem>>, vector<8x32xf32>,
    %124 = vector.extract_strided_slice %2 {offsets = [0, 15], sizes = [8, 1], strides = [1, 1]} : vector<8x16xf32> to vector<8x1xf32>
    %125 = vector.broadcast %124 : vector<8x1xf32> to vector<8x32xf32>
    %126 = vector.broadcast %3 : vector<1x32xf32> to vector<8x32xf32>
    %127 = arith.mulf %125, %126 : vector<8x32xf32>
    %c15 = arith.constant 15 : index
    %c0_37 = arith.constant 0 : index
    %128 = vector.load %arg5[%c15, %c0_37] : memref<16x32xf32, #tpu.memory_space<vmem>>, vector<1x32xf32>
    %129 = vector.broadcast %128 : vector<1x32xf32> to vector<8x32xf32>
    %130 = arith.addf %127, %129 : vector<8x32xf32>
    %c0_38 = arith.constant 0 : index
    %c480 = arith.constant 480 : index
    %131 = vector.load %arg6[%c0_38, %c480] : memref<8x512xf32, #tpu.memory_space<vmem>>, vector<8x32xf32>
    tpu.vector_store %arg6[%c0_38, %c480], %130 {strides = array<i32>} : memref<8x512xf32, #tpu.memory_space<vmem>>, vector<8x32xf32>,
    return
  }
  func.func @transform_0(%arg0: i32, %arg1: i32) -> (i32, i32) {
    %c0_i32 = arith.constant 0 : i32
    %c0_i32_0 = arith.constant 0 : i32
    return %arg0, %c0_i32 : i32, i32
  }
  func.func @transform_1(%arg0: i32, %arg1: i32) -> (i32, i32) {
    %c0_i32 = arith.constant 0 : i32
    %c0_i32_0 = arith.constant 0 : i32
    return %arg1, %c0_i32 : i32, i32
  }
  func.func @transform_2(%arg0: i32, %arg1: i32) -> (i32, i32) {
    %c0_i32 = arith.constant 0 : i32
    %c0_i32_0 = arith.constant 0 : i32
    %c0_i32_1 = arith.constant 0 : i32
    return %c0_i32, %c0_i32_0 : i32, i32
  }
  func.func @transform_3(%arg0: i32, %arg1: i32) -> (i32, i32) {
    %c0_i32 = arith.constant 0 : i32
    %c0_i32_0 = arith.constant 0 : i32
    return %arg1, %c0_i32 : i32, i32
  }
  func.func @transform_4(%arg0: i32, %arg1: i32) -> (i32, i32) {
    %c0_i32 = arith.constant 0 : i32
    return %arg0, %arg1 : i32, i32
  }
}

</mosaic_0001>

<llo_original>
// kernel: tpu_custom_call.1
$region0: #{tpu_custom_call.1}
  #allocation0 [shape = 'u32[]', space=smem, size = 0x4, offset = 0x4, fixed_abs, tag = 'smem constant byte address 0x4 - core index']
  #allocation1 [shape = 'u32[144,128]{1,0:T(1,128)}', space=vmem, size = 0x12000, scoped, tag = 'internal scratch']
  %s0 = inlined_call_operand.hbm [shape: f32[8,32], index: 0, kind: input, shape index: {}]
  %s1 = inlined_call_operand.hbm [shape: f32[16,32], index: 1, kind: input, shape index: {}]
  %s2 = inlined_call_operand.vmem [shape: f32[1,32], index: 2, kind: input, shape index: {}]
  %s3 = inlined_call_operand.hbm [shape: f32[16,32], index: 3, kind: input, shape index: {}]
  %s4 = inlined_call_operand.hbm [shape: f32[8,512], index: 4, kind: output, shape index: {}]
  %s5 = sld [smem:[#allocation0]]
  $region38: #{tpu_custom_call.1} parent=0
    _
  %s7 = ssub.s32 1, %s5
  %s8 = scalar_select 0, %s7, %s5
  $region1: #{tpu_custom_call.1} parent=0
    #allocation2 [shape = 'u8[4096]{0}', space=vmem, size = 0x1000, scoped, tag = 'input window, operand 0, single buffered']
    #allocation3 [shape = 's32[1]{0}', space=sflag, size = 0x4, scoped, tag = 'scoped memory for tpu_custom_call.1']
    #allocation4 [shape = 's32[1]{0}', space=sflag, size = 0x4, scoped, tag = 'scoped memory for tpu_custom_call.1']
    #allocation5 [shape = 'u8[8192]{0}', space=vmem, size = 0x2000, scoped, tag = 'input window, operand 1, single buffered']
    #allocation6 [shape = 's32[1]{0}', space=sflag, size = 0x4, scoped, tag = 'scoped memory for tpu_custom_call.1']
    #allocation7 [shape = 'u8[8192]{0}', space=vmem, size = 0x2000, scoped, tag = 'input window, operand 3, single buffered']
    #allocation8 [shape = 'u8[16384]{0}', space=vmem, size = 0x4000, scoped, tag = 'output window, operand 0, single buffered']
    %9 = vsyncpa [#allocation3], 0
    %10 = vsyncpa [#allocation6], 0
    %11 = vsyncpa [#allocation4], 0
    // Predicated region
    $region2: #{tpu_custom_call.1} parent=1 // pred_check
      _
    $region3: #{tpu_custom_call.1} parent=1 // pred_check_branch
      %13 = sbr.rel (0) target = $region5
    $region4: #{tpu_custom_call.1} parent=1 // pred_region
      %s15 = ssub.s32 128, 128
      %16 = vsyncadd [#allocation3], %s15
      %s18 = sshll.u32 [#allocation2], 4
      %s19 = int_to_ptr.vmem [resolvable:$true] %s18
      %21 = dma.hbm_to_vmem [thread:$0]  %s0, 128, %s19, [#allocation3]
    $region5: #{tpu_custom_call.1} parent=1 // pred_fallthru
      _
    // Predicated region
    $region6: #{tpu_custom_call.1} parent=1 // pred_check
      _
    $region7: #{tpu_custom_call.1} parent=1 // pred_check_branch
      %23 = sbr.rel (0) target = $region9
    $region8: #{tpu_custom_call.1} parent=1 // pred_region
      %s25 = ssub.s32 256, 256
      %26 = vsyncadd [#allocation6], %s25
      %s27 = sshll.u32 [#allocation5], 4
      %s28 = int_to_ptr.vmem [resolvable:$true] %s27
      %33 = dma.hbm_to_vmem [thread:$0]  %s1, 256, %s28, [#allocation6], 128, 128, 8
    $region9: #{tpu_custom_call.1} parent=1 // pred_fallthru
      _
    // Predicated region
    $region10: #{tpu_custom_call.1} parent=1 // pred_check
      _
    $region11: #{tpu_custom_call.1} parent=1 // pred_check_branch
      %35 = sbr.rel (0) target = $region13
    $region12: #{tpu_custom_call.1} parent=1 // pred_region
      _
    $region13: #{tpu_custom_call.1} parent=1 // pred_fallthru
      _
    // Predicated region
    $region14: #{tpu_custom_call.1} parent=1 // pred_check
      _
    $region15: #{tpu_custom_call.1} parent=1 // pred_check_branch
      %37 = sbr.rel (0) target = $region17
    $region16: #{tpu_custom_call.1} parent=1 // pred_region
      %s39 = ssub.s32 256, 256
      %40 = vsyncadd [#allocation6], %s39
      %s41 = sshll.u32 [#allocation7], 4
      %s42 = int_to_ptr.vmem [resolvable:$true] %s41
      %47 = dma.hbm_to_vmem [thread:$0]  %s3, 256, %s42, [#allocation6], 128, 128, 8
    $region17: #{tpu_custom_call.1} parent=1 // pred_fallthru
      _
    // Predicated region
    $region18: #{tpu_custom_call.1} parent=1 // pred_check
      _
    $region19: #{tpu_custom_call.1} parent=1 // pred_check_branch
      %49 = sbr.rel (0) target = $region21
    $region20: #{tpu_custom_call.1} parent=1 // pred_region
      %50 = dma.done [#allocation3], 128
    $region21: #{tpu_custom_call.1} parent=1 // pred_fallthru
      _
    // Predicated region
    $region22: #{tpu_custom_call.1} parent=1 // pred_check
      _
    $region23: #{tpu_custom_call.1} parent=1 // pred_check_branch
      %52 = sbr.rel (0) target = $region25
    $region24: #{tpu_custom_call.1} parent=1 // pred_region
      %53 = dma.done [#allocation6], 256
    $region25: #{tpu_custom_call.1} parent=1 // pred_fallthru
      _
    // Predicated region
    $region26: #{tpu_custom_call.1} parent=1 // pred_check
      _
    $region27: #{tpu_custom_call.1} parent=1 // pred_check_branch
      %55 = sbr.rel (0) target = $region29
    $region28: #{tpu_custom_call.1} parent=1 // pred_region
      %56 = dma.done [#allocation6], 256
    $region29: #{tpu_custom_call.1} parent=1 // pred_fallthru
      _
    %v57 = vld [vmem:[#allocation2] sm:$0xff]
    %v58 = vld [vmem:[#allocation5] sm:$0xff]
    %v59 = vld [vmem:[#allocation5 + $0x8] sm:$0xff]
    %vm60 = vcmask 261120
    %v62 = vsel %vm60, %v57, 0
    %v65 = vsel %vm60, %v58, 0
    %v68 = vsel %vm60, %v59, 0
    %70 = vmatprep.subr.mxu0 0.0
    %71 = vmatpush1.xpose.msra.mxu0 %v65
    %72 = vmatprep.subr.mxu0 0.0
    %73 = vmatpush1.xpose.msra.mxu0 %v68
    %74 = vmatprep.subr.mxu0 0.0
    %75 = vmatpush1.xpose.msra.mxu0 0.0
    %76 = vmatprep.subr.mxu0 0.0
    %77 = vmatpush1.xpose.msra.mxu0 0.0
    %78 = vmatprep.subr.mxu0 0.0
    %79 = vmatpush1.xpose.msra.mxu0 0.0
    %80 = vmatprep.subr.mxu0 0.0
    %81 = vmatpush1.xpose.msra.mxu0 0.0
    %82 = vmatprep.subr.mxu0 0.0
    %83 = vmatpush1.xpose.msra.mxu0 0.0
    %84 = vmatprep.subr.mxu0 0.0
    %85 = vmatpush1.xpose.msra.mxu0 0.0
    %86 = vmatprep.subr.mxu0 0.0
    %87 = vmatpush1.xpose.msra.mxu0 0.0
    %88 = vmatprep.subr.mxu0 0.0
    %89 = vmatpush1.xpose.msra.mxu0 0.0
    %90 = vmatprep.subr.mxu0 0.0
    %91 = vmatpush1.xpose.msra.mxu0 0.0
    %92 = vmatprep.subr.mxu0 0.0
    %93 = vmatpush1.xpose.msra.mxu0 0.0
    %94 = vmatprep.subr.mxu0 0.0
    %95 = vmatpush1.xpose.msra.mxu0 0.0
    %96 = vmatprep.subr.mxu0 0.0
    %97 = vmatpush1.xpose.msra.mxu0 0.0
    %98 = vmatprep.subr.mxu0 0.0
    %99 = vmatpush1.xpose.msra.mxu0 0.0
    %100 = vmatprep.subr.mxu0 0.0
    %101 = vmatpush1.xpose.msra.mxu0 0.0
    %102 = vmatprep.subr.mxu0 0.0
    %103 = vmatpush1.xpose.msra.mxu0 0.0
    %104 = vmatprep.subr.mxu0 0.0
    %105 = vmatpush1.xpose.msra.mxu0 0.0
    %106 = vmatprep.subr.mxu0 0.0
    %107 = vmatpush1.xpose.msra.mxu0 0.0
    %108 = vmatprep.subr.mxu0 0.0
    %109 = vmatpush1.xpose.msra.mxu0 0.0
    %110 = vmatprep.subr.mxu0 0.0
    %111 = vmatpush1.xpose.msra.mxu0 0.0
    %112 = vmatprep.subr.mxu0 0.0
    %113 = vmatpush1.xpose.msra.mxu0 0.0
    %114 = vmatprep.subr.mxu0 0.0
    %115 = vmatpush1.xpose.msra.mxu0 0.0
    %116 = vmatprep.subr.mxu0 0.0
    %117 = vmatpush1.xpose.msra.mxu0 0.0
    %118 = vmatprep.subr.mxu0 0.0
    %119 = vmatpush1.xpose.msra.mxu0 0.0
    %120 = vmatprep.subr.mxu0 0.0
    %121 = vmatpush1.xpose.msra.mxu0 0.0
    %122 = vmatprep.subr.mxu0 0.0
    %123 = vmatpush1.xpose.msra.mxu0 0.0
    %124 = vmatprep.subr.mxu0 0.0
    %125 = vmatpush1.xpose.msra.mxu0 0.0
    %126 = vmatprep.subr.mxu0 0.0
    %127 = vmatpush1.xpose.msra.mxu0 0.0
    %128 = vmatprep.subr.mxu0 0.0
    %129 = vmatpush1.xpose.msra.mxu0 0.0
    %130 = vmatprep.subr.mxu0 0.0
    %131 = vmatpush1.xpose.msra.mxu0 0.0
    %132 = vmatprep.subr.mxu0 0.0
    %133 = vmatpush1.xpose.msra.mxu0 0.0
    %134 = vmatprep.mubr.f32.mxu0 0.0
    %135 = vmatmul.mubr.f32.gmra.mrb[0].mxu0 %v62
    %v136 = vpop.f32.mrb[0].mxu0
    %v137 = vadd.f32 0.0, %v136
    %v138 = vpop.f32.mrb[0].mxu0
    %139 = vdwg.mxu0
    %v140 = vld [vmem:[%s2] sm:$0x1]
    %142 = vset.pattern.permute.xlu0 0
    %143 = vperm.xlu0 %142, %v137
    %v144 = vpop.permute.xlu0 %143
    %v147 = vlaneseq
    %v148 = vshrl.u32 %v147, 7
    %v149 = vsub.s32 0, %v148
    %v150 = vrot.slane %v140, %v149
    %v152 = vmul.f32 %v144, %v150
    %v153 = vld [vmem:[#allocation7] sm:$0x1]
    %v154 = vlaneseq
    %v155 = vshrl.u32 %v154, 7
    %v156 = vsub.s32 0, %v155
    %v157 = vrot.slane %v153, %v156
    %v158 = vadd.f32 %v152, %v157
    %159 = vst.msk [vmem:[#allocation8] sm:$0xff] %vm60, %v158
    %160 = vset.pattern.permute.xlu0 1
    %161 = vperm.xlu0 %160, %v137
    %v162 = vpop.permute.xlu0 %161
    %v164 = vmul.f32 %v162, %v150
    %v165 = vld [vmem:[#allocation7 + $0x1] sm:$0x1]
    %v166 = vlaneseq
    %v167 = vshrl.u32 %v166, 7
    %v168 = vsub.s32 0, %v167
    %v169 = vrot.slane %v165, %v168
    %v170 = vadd.f32 %v164, %v169
    %172 = vrot.lane.b32.xlu0 %v170, 32
    %v173 = vpop.permute.xlu0 %172
    %vm175 = vcmask 523520
    %176 = vst.msk [vmem:[#allocation8] sm:$0xff] %vm175, %v173
    %177 = vset.pattern.permute.xlu0 2
    %178 = vperm.xlu0 %177, %v137
    %v179 = vpop.permute.xlu0 %178
    %v181 = vmul.f32 %v179, %v150
    %v182 = vld [vmem:[#allocation7 + $0x2] sm:$0x1]
    %v183 = vlaneseq
    %v184 = vshrl.u32 %v183, 7
    %v185 = vsub.s32 0, %v184
    %v186 = vrot.slane %v182, %v185
    %v187 = vadd.f32 %v181, %v186
    %189 = vrot.lane.b32.xlu0 %v187, 64
    %v190 = vpop.permute.xlu0 %189
    %vm192 = vcmask 785920
    %193 = vst.msk [vmem:[#allocation8] sm:$0xff] %vm192, %v190
    %194 = vset.pattern.permute.xlu0 3
    %195 = vperm.xlu0 %194, %v137
    %v196 = vpop.permute.xlu0 %195
    %v198 = vmul.f32 %v196, %v150
    %v199 = vld [vmem:[#allocation7 + $0x3] sm:$0x1]
    %v200 = vlaneseq
    %v201 = vshrl.u32 %v200, 7
    %v202 = vsub.s32 0, %v201
    %v203 = vrot.slane %v199, %v202
    %v204 = vadd.f32 %v198, %v203
    %206 = vrot.lane.b32.xlu0 %v204, 96
    %v207 = vpop.permute.xlu0 %206
    %vm209 = vcmask 1048320
    %210 = vst.msk [vmem:[#allocation8] sm:$0xff] %vm209, %v207
    %211 = vset.pattern.permute.xlu0 4
    %212 = vperm.xlu0 %211, %v137
    %v213 = vpop.permute.xlu0 %212
    %v215 = vmul.f32 %v213, %v150
    %v216 = vld [vmem:[#allocation7 + $0x4] sm:$0x1]
    %v217 = vlaneseq
    %v218 = vshrl.u32 %v217, 7
    %v219 = vsub.s32 0, %v218
    %v220 = vrot.slane %v216, %v219
    %v221 = vadd.f32 %v215, %v220
    %222 = vst.msk [vmem:[#allocation8 + $0x8] sm:$0xff] %vm60, %v221
    %223 = vset.pattern.permute.xlu0 5
    %224 = vperm.xlu0 %223, %v137
    %v225 = vpop.permute.xlu0 %224
    %v227 = vmul.f32 %v225, %v150
    %v228 = vld [vmem:[#allocation7 + $0x5] sm:$0x1]
    %v229 = vlaneseq
    %v230 = vshrl.u32 %v229, 7
    %v231 = vsub.s32 0, %v230
    %v232 = vrot.slane %v228, %v231
    %v233 = vadd.f32 %v227, %v232
    %235 = vrot.lane.b32.xlu0 %v233, 32
    %v236 = vpop.permute.xlu0 %235
    %238 = vst.msk [vmem:[#allocation8 + $0x8] sm:$0xff] %vm175, %v236
    %239 = vset.pattern.permute.xlu0 6
    %240 = vperm.xlu0 %239, %v137
    %v241 = vpop.permute.xlu0 %240
    %v243 = vmul.f32 %v241, %v150
    %v244 = vld [vmem:[#allocation7 + $0x6] sm:$0x1]
    %v245 = vlaneseq
    %v246 = vshrl.u32 %v245, 7
    %v247 = vsub.s32 0, %v246
    %v248 = vrot.slane %v244, %v247
    %v249 = vadd.f32 %v243, %v248
    %251 = vrot.lane.b32.xlu0 %v249, 64
    %v252 = vpop.permute.xlu0 %251
    %254 = vst.msk [vmem:[#allocation8 + $0x8] sm:$0xff] %vm192, %v252
    %255 = vset.pattern.permute.xlu0 7
    %256 = vperm.xlu0 %255, %v137
    %v257 = vpop.permute.xlu0 %256
    %v259 = vmul.f32 %v257, %v150
    %v260 = vld [vmem:[#allocation7 + $0x7] sm:$0x1]
    %v261 = vlaneseq
    %v262 = vshrl.u32 %v261, 7
    %v263 = vsub.s32 0, %v262
    %v264 = vrot.slane %v260, %v263
    %v265 = vadd.f32 %v259, %v264
    %267 = vrot.lane.b32.xlu0 %v265, 96
    %v268 = vpop.permute.xlu0 %267
    %270 = vst.msk [vmem:[#allocation8 + $0x8] sm:$0xff] %vm209, %v268
    %271 = vset.pattern.permute.xlu0 8
    %272 = vperm.xlu0 %271, %v137
    %v273 = vpop.permute.xlu0 %272
    %v275 = vmul.f32 %v273, %v150
    %v276 = vld [vmem:[#allocation7 + $0x8] sm:$0x1]
    %v277 = vlaneseq
    %v278 = vshrl.u32 %v277, 7
    %v279 = vsub.s32 0, %v278
    %v280 = vrot.slane %v276, %v279
    %v281 = vadd.f32 %v275, %v280
    %282 = vst.msk [vmem:[#allocation8 + $0x10] sm:$0xff] %vm60, %v281
    %283 = vset.pattern.permute.xlu0 9
    %284 = vperm.xlu0 %283, %v137
    %v285 = vpop.permute.xlu0 %284
    %v287 = vmul.f32 %v285, %v150
    %v288 = vld [vmem:[#allocation7 + $0x9] sm:$0x1]
    %v289 = vlaneseq
    %v290 = vshrl.u32 %v289, 7
    %v291 = vsub.s32 0, %v290
    %v292 = vrot.slane %v288, %v291
    %v293 = vadd.f32 %v287, %v292
    %295 = vrot.lane.b32.xlu0 %v293, 32
    %v296 = vpop.permute.xlu0 %295
    %298 = vst.msk [vmem:[#allocation8 + $0x10] sm:$0xff] %vm175, %v296
    %299 = vset.pattern.permute.xlu0 10
    %300 = vperm.xlu0 %299, %v137
    %v301 = vpop.permute.xlu0 %300
    %v303 = vmul.f32 %v301, %v150
    %v304 = vld [vmem:[#allocation7 + $0xa] sm:$0x1]
    %v305 = vlaneseq
    %v306 = vshrl.u32 %v305, 7
    %v307 = vsub.s32 0, %v306
    %v308 = vrot.slane %v304, %v307
    %v309 = vadd.f32 %v303, %v308
    %311 = vrot.lane.b32.xlu0 %v309, 64
    %v312 = vpop.permute.xlu0 %311
    %314 = vst.msk [vmem:[#allocation8 + $0x10] sm:$0xff] %vm192, %v312
    %315 = vset.pattern.permute.xlu0 11
    %316 = vperm.xlu0 %315, %v137
    %v317 = vpop.permute.xlu0 %316
    %v319 = vmul.f32 %v317, %v150
    %v320 = vld [vmem:[#allocation7 + $0xb] sm:$0x1]
    %v321 = vlaneseq
    %v322 = vshrl.u32 %v321, 7
    %v323 = vsub.s32 0, %v322
    %v324 = vrot.slane %v320, %v323
    %v325 = vadd.f32 %v319, %v324
    %327 = vrot.lane.b32.xlu0 %v325, 96
    %v328 = vpop.permute.xlu0 %327
    %330 = vst.msk [vmem:[#allocation8 + $0x10] sm:$0xff] %vm209, %v328
    %331 = vset.pattern.permute.xlu0 12
    %332 = vperm.xlu0 %331, %v137
    %v333 = vpop.permute.xlu0 %332
    %v335 = vmul.f32 %v333, %v150
    %v336 = vld [vmem:[#allocation7 + $0xc] sm:$0x1]
    %v337 = vlaneseq
    %v338 = vshrl.u32 %v337, 7
    %v339 = vsub.s32 0, %v338
    %v340 = vrot.slane %v336, %v339
    %v341 = vadd.f32 %v335, %v340
    %342 = vst.msk [vmem:[#allocation8 + $0x18] sm:$0xff] %vm60, %v341
    %343 = vset.pattern.permute.xlu0 13
    %344 = vperm.xlu0 %343, %v137
    %v345 = vpop.permute.xlu0 %344
    %v347 = vmul.f32 %v345, %v150
    %v348 = vld [vmem:[#allocation7 + $0xd] sm:$0x1]
    %v349 = vlaneseq
    %v350 = vshrl.u32 %v349, 7
    %v351 = vsub.s32 0, %v350
    %v352 = vrot.slane %v348, %v351
    %v353 = vadd.f32 %v347, %v352
    %355 = vrot.lane.b32.xlu0 %v353, 32
    %v356 = vpop.permute.xlu0 %355
    %358 = vst.msk [vmem:[#allocation8 + $0x18] sm:$0xff] %vm175, %v356
    %359 = vset.pattern.permute.xlu0 14
    %360 = vperm.xlu0 %359, %v137
    %v361 = vpop.permute.xlu0 %360
    %v363 = vmul.f32 %v361, %v150
    %v364 = vld [vmem:[#allocation7 + $0xe] sm:$0x1]
    %v365 = vlaneseq
    %v366 = vshrl.u32 %v365, 7
    %v367 = vsub.s32 0, %v366
    %v368 = vrot.slane %v364, %v367
    %v369 = vadd.f32 %v363, %v368
    %371 = vrot.lane.b32.xlu0 %v369, 64
    %v372 = vpop.permute.xlu0 %371
    %374 = vst.msk [vmem:[#allocation8 + $0x18] sm:$0xff] %vm192, %v372
    %375 = vset.pattern.permute.xlu0 15
    %376 = vperm.xlu0 %375, %v137
    %v377 = vpop.permute.xlu0 %376
    %v379 = vmul.f32 %v377, %v150
    %v380 = vld [vmem:[#allocation7 + $0xf] sm:$0x1]
    %v381 = vlaneseq
    %v382 = vshrl.u32 %v381, 7
    %v383 = vsub.s32 0, %v382
    %v384 = vrot.slane %v380, %v383
    %v385 = vadd.f32 %v379, %v384
    %387 = vrot.lane.b32.xlu0 %v385, 96
    %v388 = vpop.permute.xlu0 %387
    %390 = vst.msk [vmem:[#allocation8 + $0x18] sm:$0xff] %vm209, %v388
    // Predicated region
    $region30: #{tpu_custom_call.1} parent=1 // pred_check
      _
    $region31: #{tpu_custom_call.1} parent=1 // pred_check_branch
      %392 = sbr.rel (0) target = $region33
    $region32: #{tpu_custom_call.1} parent=1 // pred_region
      %s394 = ssub.s32 512, 512
      %395 = vsyncadd [#allocation4], %s394
      %s397 = sshll.u32 [#allocation8], 4
      %s398 = int_to_ptr.vmem [resolvable:$true] %s397
      %400 = dma.vmem_to_hbm [thread:$0]  %s398, 512, %s4, [#allocation4]
    $region33: #{tpu_custom_call.1} parent=1 // pred_fallthru
      _
    // Predicated region
    $region34: #{tpu_custom_call.1} parent=1 // pred_check
      _
    $region35: #{tpu_custom_call.1} parent=1 // pred_check_branch
      %402 = sbr.rel (0) target = $region37
    $region36: #{tpu_custom_call.1} parent=1 // pred_region
      %403 = dma.done [#allocation4], 512
    $region37: #{tpu_custom_call.1} parent=1 // pred_fallthru
      _
    %404 = vsyncpa [#allocation3], 1
    %405 = vsyncpa [#allocation6], 1
    %406 = vsyncpa [#allocation4], 1

</llo_original>
